<compile_context>
chip_gen: v5e
topology: v5e:2x2
jax: 0.10.0
libtpu: 0.0.40
codegen_flags: <defaults>
</compile_context>

<pallas_src>
import jax
import jax.numpy as jnp
from jax.experimental import pallas as pl
from jax.experimental.pallas import tpu as pltpu

HIDDEN = 55          # real hidden width of the PyTorch model
HIDDEN_PAD = 128     # lane-padded hidden width (do NOT widen: kernel is HBM-bound)
BN_EPS = 1e-5

# NT dot: contract the last dim of both operands -> (M, K) x (N, K) -> (M, N)
_NT_DIMS = (((1,), (1,)), ((), ()))


def _round_up(x, m):
    return (x + m - 1) // m * m


def _pad_to(a, shape):
    return jnp.pad(a, [(0, t - s) for s, t in zip(a.shape, shape)])


# ---------------------------------------------------------------------------
# Pass 1 (stats only): per-tile partial sum / sum-of-squares of
#   h2 = fc2(relu(fc1(x)))
# Output block is (1, 8, 128): sublane 0 = sum, sublane 1 = sumsq, rest zero.
# ---------------------------------------------------------------------------
def make_stats_kernel(n_valid, tile_n):
    def stats_kernel(x_ref, w1_ref, b1_ref, w2_ref, b2_ref, part_ref):
        h1 = jnp.maximum(
            jnp.dot(x_ref[...], w1_ref[...],
                    preferred_element_type=jnp.float32) + b1_ref[...], 0.0)
        h2 = jnp.dot(h1, w2_ref[...],
                     preferred_element_type=jnp.float32) + b2_ref[...]

        # Mask batch-padding rows so they do not pollute the BN statistics.
        row = (pl.program_id(0) * tile_n
               + jax.lax.broadcasted_iota(jnp.int32, h2.shape, 0))
        h2 = jnp.where(row < n_valid, h2, 0.0)

        s1 = jnp.sum(h2, axis=0, keepdims=True)        # (1, 128)
        s2 = jnp.sum(h2 * h2, axis=0, keepdims=True)   # (1, 128)

        sub = jax.lax.broadcasted_iota(jnp.int32, (8, HIDDEN_PAD), 0)
        part = jnp.where(sub == 0, s1, jnp.where(sub == 1, s2, 0.0))
        part_ref[...] = part[None]                     # (1, 8, 128), unmasked store

    return stats_kernel


# ---------------------------------------------------------------------------
# Pass 2: recompute h2, fold BN in-kernel, ReLU, fc3, store transposed output.
#   y^T = w3^T @ h3^T  via NT dot -> (out_rows, tile_n) lane-dense store.
# ---------------------------------------------------------------------------
def make_apply_kernel(inv_n):
    def apply_kernel(x_ref, w1_ref, b1_ref, w2_ref, b2_ref,
                     s1_ref, s2_ref, gamma_ref, beta_ref, w3t_ref, b3t_ref,
                     o_ref):
        h1 = jnp.maximum(
            jnp.dot(x_ref[...], w1_ref[...],
                    preferred_element_type=jnp.float32) + b1_ref[...], 0.0)
        h2 = jnp.dot(h1, w2_ref[...],
                     preferred_element_type=jnp.float32) + b2_ref[...]

        mean = s1_ref[...] * inv_n
        var = jnp.maximum(s2_ref[...] * inv_n - mean * mean, 0.0)
        scale = gamma_ref[...] * jax.lax.rsqrt(var + BN_EPS)   # padded lanes: gamma=0
        shift = beta_ref[...] - mean * scale

        h3 = jnp.maximum(h2 * scale + shift, 0.0)
        y_t = jax.lax.dot_general(w3t_ref[...], h3, _NT_DIMS,
                                  preferred_element_type=jnp.float32)
        o_ref[...] = y_t + b3t_ref[...]

    return apply_kernel


# ---------------------------------------------------------------------------
# Small-batch fast path: one tile -> single fused kernel (stats + fold + apply).
# ---------------------------------------------------------------------------
def make_fused_kernel(n_valid, inv_n):
    def fused_kernel(x_ref, w1_ref, b1_ref, w2_ref, b2_ref,
                     gamma_ref, beta_ref, w3t_ref, b3t_ref, o_ref):
        h1 = jnp.maximum(
            jnp.dot(x_ref[...], w1_ref[...],
                    preferred_element_type=jnp.float32) + b1_ref[...], 0.0)
        h2 = jnp.dot(h1, w2_ref[...],
                     preferred_element_type=jnp.float32) + b2_ref[...]

        row = jax.lax.broadcasted_iota(jnp.int32, h2.shape, 0)
        h2m = jnp.where(row < n_valid, h2, 0.0)
        s1 = jnp.sum(h2m, axis=0, keepdims=True)
        s2 = jnp.sum(h2m * h2m, axis=0, keepdims=True)

        mean = s1 * inv_n
        var = jnp.maximum(s2 * inv_n - mean * mean, 0.0)
        scale = gamma_ref[...] * jax.lax.rsqrt(var + BN_EPS)
        shift = beta_ref[...] - mean * scale

        h3 = jnp.maximum(h2 * scale + shift, 0.0)
        y_t = jax.lax.dot_general(w3t_ref[...], h3, _NT_DIMS,
                                  preferred_element_type=jnp.float32)
        o_ref[...] = y_t + b3t_ref[...]

    return fused_kernel


# ---------------------------------------------------------------------------
# Host-side wrapper
# ---------------------------------------------------------------------------
def fire_prediction_forward(x, params, *, tile_n=2048):
    """x: (N, input_shape) f32 -> (N, output_shape) f32, training-mode BN."""
    n, in_dim = x.shape
    assert n > 0, "batch size must be positive (BN divides by n)"
    out_dim = params["w3"].shape[1]
    out_rows = _round_up(out_dim, 8)          # sublane-aligned transposed output

    # --- lane-dense, zero-padded parameters -------------------------------
    w1 = _pad_to(params["w1"], (in_dim, HIDDEN_PAD))
    b1 = _pad_to(params["b1"], (1, HIDDEN_PAD))
    w2 = _pad_to(params["w2"], (HIDDEN_PAD, HIDDEN_PAD))
    b2 = _pad_to(params["b2"], (1, HIDDEN_PAD))
    gamma = _pad_to(params["gamma"], (1, HIDDEN_PAD))   # zero pad => scale=0 on pad lanes
    beta = _pad_to(params["beta"], (1, HIDDEN_PAD))
    w3t = _pad_to(params["w3"].T, (out_rows, HIDDEN_PAD))
    b3t = _pad_to(params["b3"].T, (out_rows, 1))

    # --- batch tiling (tile_n multiple of 128 for the lane-packed output) --
    tile_n = max(128, min(_round_up(tile_n, 128), _round_up(n, 128)))
    n_pad = _round_up(n, tile_n)
    n_tiles = n_pad // tile_n
    x_p = _pad_to(x, (n_pad, in_dim))
    inv_n = 1.0 / float(n)

    # ---- small-batch fast path: everything in one pallas_call -------------
    if n_tiles == 1:
        y_t = pl.pallas_call(
            make_fused_kernel(n, inv_n),
            out_shape=jax.ShapeDtypeStruct((out_rows, n_pad), jnp.float32),
        )(x_p, w1, b1, w2, b2, gamma, beta, w3t, b3t)
        return y_t[:out_dim, :n].T

    cparams = pltpu.CompilerParams(dimension_semantics=("parallel",))

    # ---- pass 1: per-tile partial BN statistics ("parallel": megacore OK) --
    parts = pl.pallas_call(
        make_stats_kernel(n, tile_n),
        out_shape=jax.ShapeDtypeStruct((n_tiles, 8, HIDDEN_PAD), jnp.float32),
        grid=(n_tiles,),
        in_specs=[pl.BlockSpec((tile_n, in_dim), lambda i: (i, 0)),
                  pl.BlockSpec((in_dim, HIDDEN_PAD), lambda i: (0, 0)),
                  pl.BlockSpec((1, HIDDEN_PAD), lambda i: (0, 0)),
                  pl.BlockSpec((HIDDEN_PAD, HIDDEN_PAD), lambda i: (0, 0)),
                  pl.BlockSpec((1, HIDDEN_PAD), lambda i: (0, 0))],
        out_specs=pl.BlockSpec((1, 8, HIDDEN_PAD), lambda i: (i, 0, 0)),
        compiler_params=cparams,
    )(x_p, w1, b1, w2, b2)

    # Tiny cross-tile reduction in plain JAX: row 0 = sum(h2), row 1 = sum(h2^2).
    stats = jnp.sum(parts, axis=0)          # (8, HIDDEN_PAD)
    s1 = stats[0:1]
    s2 = stats[1:2]

    # ---- pass 2: recompute h2, fold BN in-kernel, fc3, lane-packed y^T ----
    y_t = pl.pallas_call(
        make_apply_kernel(inv_n),
        out_shape=jax.ShapeDtypeStruct((out_rows, n_pad), jnp.float32),
        grid=(n_tiles,),
        in_specs=[pl.BlockSpec((tile_n, in_dim), lambda i: (i, 0)),
                  pl.BlockSpec((in_dim, HIDDEN_PAD), lambda i: (0, 0)),
                  pl.BlockSpec((1, HIDDEN_PAD), lambda i: (0, 0)),
                  pl.BlockSpec((HIDDEN_PAD, HIDDEN_PAD), lambda i: (0, 0)),
                  pl.BlockSpec((1, HIDDEN_PAD), lambda i: (0, 0)),
                  pl.BlockSpec((1, HIDDEN_PAD), lambda i: (0, 0)),
                  pl.BlockSpec((1, HIDDEN_PAD), lambda i: (0, 0)),
                  pl.BlockSpec((1, HIDDEN_PAD), lambda i: (0, 0)),
                  pl.BlockSpec((1, HIDDEN_PAD), lambda i: (0, 0)),
                  pl.BlockSpec((out_rows, HIDDEN_PAD), lambda i: (0, 0)),
                  pl.BlockSpec((out_rows, 1), lambda i: (0, 0))],
        out_specs=pl.BlockSpec((out_rows, tile_n), lambda i: (0, i)),
        compiler_params=cparams,
    )(x_p, w1, b1, w2, b2, s1, s2, gamma, beta, w3t, b3t)

    return y_t[:out_dim, :n].T


# ---------------------------------------------------------------------------
# Parameters (PyTorch nn.Linear-style init; weights stored as (in, out)) and a
# pure-JAX reference for verification.
# ---------------------------------------------------------------------------
def init_params(key, input_shape: int, output_shape: int = 1):
    ks = jax.random.split(key, 3)

    def lin(k, fan_in, fan_out):
        bound = 1.0 / jnp.sqrt(fan_in)
        kw, kb = jax.random.split(k)
        w = jax.random.uniform(kw, (fan_in, fan_out), jnp.float32, -bound, bound)
        b = jax.random.uniform(kb, (1, fan_out), jnp.float32, -bound, bound)
        return w, b

    w1, b1 = lin(ks[0], input_shape, HIDDEN)
    w2, b2 = lin(ks[1], HIDDEN, HIDDEN)
    w3, b3 = lin(ks[2], HIDDEN, output_shape)
    gamma = jnp.ones((1, HIDDEN), jnp.float32)    # BatchNorm1d default init
    beta = jnp.zeros((1, HIDDEN), jnp.float32)
    return {"w1": w1, "b1": b1, "w2": w2, "b2": b2,
            "gamma": gamma, "beta": beta, "w3": w3, "b3": b3}


def reference_forward(x, p):
    h1 = jnp.maximum(x @ p["w1"] + p["b1"], 0.0)
    h2 = h1 @ p["w2"] + p["b2"]
    mean = jnp.mean(h2, axis=0, keepdims=True)
    var = jnp.mean((h2 - mean) ** 2, axis=0, keepdims=True)  # biased (training mode)
    bn = (h2 - mean) / jnp.sqrt(var + BN_EPS) * p["gamma"] + p["beta"]
    h3 = jnp.maximum(bn, 0.0)
    return h3 @ p["w3"] + p["b3"]


if __name__ == "__main__":
    key = jax.random.PRNGKey(0)
    k_x, k_p = jax.random.split(key)

    batch = 200          # not a multiple of the tile -> exercises batch masking
    input_shape = 16
    output_shape = 1

    x = jax.random.normal(k_x, (batch, input_shape), jnp.float32)
    params = init_params(k_p, input_shape, output_shape)
    ref = reference_forward(x, params)

    # Default tile -> one batch tile -> fused single-kernel fast path.
    out_fused = jax.block_until_ready(fire_prediction_forward(x, params))
    # Small tile -> two batch tiles -> two-pass (stats + apply) pipelined path.
    out_tiled = jax.block_until_ready(fire_prediction_forward(x, params, tile_n=128))

    for out in (out_fused, out_tiled):
        assert out.shape == (batch, output_shape)
        err = float(jnp.max(jnp.abs(out - ref)))
        assert jnp.allclose(out, ref, atol=1e-3, rtol=1e-3), f"max abs err={err}"

    print("KERNEL_OK")
</pallas_src>

<mosaic_0001>
module attributes {stable_mosaic.version = 11 : i64} {
  func.func @fused_kernel(%arg0: memref<256x16xf32, #tpu.memory_space<vmem>>, %arg1: memref<16x128xf32, #tpu.memory_space<vmem>>, %arg2: memref<1x128xf32, #tpu.memory_space<vmem>>, %arg3: memref<128x128xf32, #tpu.memory_space<vmem>>, %arg4: memref<1x128xf32, #tpu.memory_space<vmem>>, %arg5: memref<1x128xf32, #tpu.memory_space<vmem>>, %arg6: memref<1x128xf32, #tpu.memory_space<vmem>>, %arg7: memref<8x128xf32, #tpu.memory_space<vmem>>, %arg8: memref<8x1xf32, #tpu.memory_space<vmem>>, %arg9: memref<8x256xf32, #tpu.memory_space<vmem>>) attributes {dimension_semantics = [], scalar_prefetch = 0 : i64, scratch_operands = 0 : i64, tpu.core_type = #tpu.core_type<tc>} {
    %c0 = arith.constant 0 : index
    %c0_0 = arith.constant 0 : index
    %0 = vector.load %arg0[%c0, %c0_0] : memref<256x16xf32, #tpu.memory_space<vmem>>, vector<256x16xf32>
    %c0_1 = arith.constant 0 : index
    %c0_2 = arith.constant 0 : index
    %1 = vector.load %arg1[%c0_1, %c0_2] : memref<16x128xf32, #tpu.memory_space<vmem>>, vector<16x128xf32>
    %cst = arith.constant dense<0.000000e+00> : vector<256x128xf32>
    %2 = tpu.matmul %0, %1, %cst {dimension_numbers = #tpu.dot_dimension_numbers<[1], [0], [0], [1], [0, 0, 1, 1], [], []>} : vector<256x16xf32>, vector<16x128xf32>, vector<256x128xf32> -> vector<256x128xf32>
    %c0_3 = arith.constant 0 : index
    %c0_4 = arith.constant 0 : index
    %3 = vector.load %arg2[%c0_3, %c0_4] : memref<1x128xf32, #tpu.memory_space<vmem>>, vector<1x128xf32>
    %4 = vector.broadcast %3 : vector<1x128xf32> to vector<256x128xf32>
    %5 = arith.addf %2, %4 : vector<256x128xf32>
    %cst_5 = arith.constant 0.000000e+00 : f32
    %6 = vector.broadcast %cst_5 : f32 to vector<256x128xf32>
    %7 = arith.maximumf %5, %6 : vector<256x128xf32>
    %c0_6 = arith.constant 0 : index
    %c0_7 = arith.constant 0 : index
    %8 = vector.load %arg3[%c0_6, %c0_7] : memref<128x128xf32, #tpu.memory_space<vmem>>, vector<128x128xf32>
    %cst_8 = arith.constant dense<0.000000e+00> : vector<256x128xf32>
    %9 = tpu.matmul %7, %8, %cst_8 {dimension_numbers = #tpu.dot_dimension_numbers<[1], [0], [0], [1], [0, 0, 1, 1], [], []>} : vector<256x128xf32>, vector<128x128xf32>, vector<256x128xf32> -> vector<256x128xf32>
    %c0_9 = arith.constant 0 : index
    %c0_10 = arith.constant 0 : index
    %10 = vector.load %arg4[%c0_9, %c0_10] : memref<1x128xf32, #tpu.memory_space<vmem>>, vector<1x128xf32>
    %11 = vector.broadcast %10 : vector<1x128xf32> to vector<256x128xf32>
    %12 = arith.addf %9, %11 : vector<256x128xf32>
    %13 = tpu.iota {dimensions = array<i32: 0>} : vector<256x128xi32>
    %c200_i32 = arith.constant 200 : i32
    %14 = vector.broadcast %c200_i32 : i32 to vector<256x128xi32>
    %15 = arith.cmpi slt, %13, %14 : vector<256x128xi32>
    %cst_11 = arith.constant 0.000000e+00 : f32
    %16 = vector.broadcast %cst_11 : f32 to vector<256x128xf32>
    %17 = arith.select %15, %12, %16 : vector<256x128xi1>, vector<256x128xf32>
    %cst_12 = arith.constant dense<0.000000e+00> : vector<128xf32>
    %18 = vector.multi_reduction <add>, %17, %cst_12 [0] : vector<256x128xf32> to vector<128xf32>
    %19 = vector.shape_cast %18 : vector<128xf32> to vector<1x128xf32>
    %20 = arith.mulf %17, %17 : vector<256x128xf32>
    %cst_13 = arith.constant dense<0.000000e+00> : vector<128xf32>
    %21 = vector.multi_reduction <add>, %20, %cst_13 [0] : vector<256x128xf32> to vector<128xf32>
    %22 = vector.shape_cast %21 : vector<128xf32> to vector<1x128xf32>
    %cst_14 = arith.constant 5.000000e-03 : f32
    %23 = vector.broadcast %cst_14 : f32 to vector<1x128xf32>
    %24 = arith.mulf %19, %23 : vector<1x128xf32>
    %cst_15 = arith.constant 5.000000e-03 : f32
    %25 = vector.broadcast %cst_15 : f32 to vector<1x128xf32>
    %26 = arith.mulf %22, %25 : vector<1x128xf32>
    %27 = arith.mulf %24, %24 : vector<1x128xf32>
    %28 = arith.subf %26, %27 : vector<1x128xf32>
    %cst_16 = arith.constant 0.000000e+00 : f32
    %29 = vector.broadcast %cst_16 : f32 to vector<1x128xf32>
    %30 = arith.maximumf %28, %29 : vector<1x128xf32>
    %c0_17 = arith.constant 0 : index
    %c0_18 = arith.constant 0 : index
    %31 = vector.load %arg5[%c0_17, %c0_18] : memref<1x128xf32, #tpu.memory_space<vmem>>, vector<1x128xf32>
    %cst_19 = arith.constant 9.99999974E-6 : f32
    %32 = vector.broadcast %cst_19 : f32 to vector<1x128xf32>
    %33 = arith.addf %30, %32 : vector<1x128xf32>
    %34 = math.rsqrt %33 : vector<1x128xf32>
    %35 = arith.mulf %31, %34 : vector<1x128xf32>
    %c0_20 = arith.constant 0 : index
    %c0_21 = arith.constant 0 : index
    %36 = vector.load %arg6[%c0_20, %c0_21] : memref<1x128xf32, #tpu.memory_space<vmem>>, vector<1x128xf32>
    %37 = arith.mulf %24, %35 : vector<1x128xf32>
    %38 = arith.subf %36, %37 : vector<1x128xf32>
    %39 = vector.broadcast %35 : vector<1x128xf32> to vector<256x128xf32>
    %40 = arith.mulf %12, %39 : vector<256x128xf32>
    %41 = vector.broadcast %38 : vector<1x128xf32> to vector<256x128xf32>
    %42 = arith.addf %40, %41 : vector<256x128xf32>
    %cst_22 = arith.constant 0.000000e+00 : f32
    %43 = vector.broadcast %cst_22 : f32 to vector<256x128xf32>
    %44 = arith.maximumf %42, %43 : vector<256x128xf32>
    %c0_23 = arith.constant 0 : index
    %c0_24 = arith.constant 0 : index
    %45 = vector.load %arg7[%c0_23, %c0_24] : memref<8x128xf32, #tpu.memory_space<vmem>>, vector<8x128xf32>
    %cst_25 = arith.constant dense<0.000000e+00> : vector<8x256xf32>
    %46 = tpu.matmul %45, %44, %cst_25 {dimension_numbers = #tpu.dot_dimension_numbers<[1], [1], [0], [0], [0, 0, 1, 0], [], []>} : vector<8x128xf32>, vector<256x128xf32>, vector<8x256xf32> -> vector<8x256xf32>
    %c0_26 = arith.constant 0 : index
    %c0_27 = arith.constant 0 : index
    %47 = vector.load %arg8[%c0_26, %c0_27] : memref<8x1xf32, #tpu.memory_space<vmem>>, vector<8x1xf32>
    %48 = vector.broadcast %47 : vector<8x1xf32> to vector<8x256xf32>
    %49 = arith.addf %46, %48 : vector<8x256xf32>
    %c0_28 = arith.constant 0 : index
    %c0_29 = arith.constant 0 : index
    %50 = vector.load %arg9[%c0_28, %c0_29] : memref<8x256xf32, #tpu.memory_space<vmem>>, vector<8x256xf32>
    tpu.vector_store %arg9[%c0_28, %c0_29], %49 {strides = array<i32>} : memref<8x256xf32, #tpu.memory_space<vmem>>, vector<8x256xf32>,
    return
  }
}

</mosaic_0001>

<llo_original>
// kernel: tpu_custom_call.1
$region0: #{tpu_custom_call.1}
  #allocation0 [shape = 'u32[]', space=smem, size = 0x4, offset = 0x4, fixed_abs, tag = 'smem constant byte address 0x4 - core index']
  #allocation1 [shape = 'u32[72,128]{1,0:T(1,128)}', space=vmem, size = 0x9000, scoped, tag = 'internal scratch']
  %s0 = inlined_call_operand.vmem [shape: f32[256,16], index: 0, kind: input, shape index: {}]
  %s1 = inlined_call_operand.vmem [shape: f32[16,128], index: 1, kind: input, shape index: {}]
  %s2 = inlined_call_operand.vmem [shape: f32[1,128], index: 2, kind: input, shape index: {}]
  %s3 = inlined_call_operand.vmem [shape: f32[128,128], index: 3, kind: input, shape index: {}]
  %s4 = inlined_call_operand.vmem [shape: f32[1,128], index: 4, kind: input, shape index: {}]
  %s5 = inlined_call_operand.vmem [shape: f32[1,128], index: 5, kind: input, shape index: {}]
  %s6 = inlined_call_operand.vmem [shape: f32[1,128], index: 6, kind: input, shape index: {}]
  %s7 = inlined_call_operand.vmem [shape: f32[8,128], index: 7, kind: input, shape index: {}]
  %s8 = inlined_call_operand.vmem [shape: f32[8,1], index: 8, kind: input, shape index: {}]
  %s9 = inlined_call_operand.hbm [shape: f32[8,256], index: 9, kind: output, shape index: {}]
  %s10 = sld [smem:[#allocation0]]
  $region46: #{tpu_custom_call.1} parent=0
    _
  %s12 = ssub.s32 1, %s10
  %s13 = scalar_select 0, %s12, %s10
  $region1: #{tpu_custom_call.1} parent=0
    #allocation2 [shape = 'u8[8192]{0}', space=vmem, size = 0x2000, scoped, tag = 'output window, operand 0, single buffered']
    #allocation3 [shape = 's32[1]{0}', space=sflag, size = 0x4, scoped, tag = 'scoped memory for tpu_custom_call.1']
    %14 = vsyncpa [#allocation3], 0
    // Predicated region
    $region2: #{tpu_custom_call.1} parent=1 // pred_check
      _
    $region3: #{tpu_custom_call.1} parent=1 // pred_check_branch
      %16 = sbr.rel (0) target = $region5
    $region4: #{tpu_custom_call.1} parent=1 // pred_region
      _
    $region5: #{tpu_custom_call.1} parent=1 // pred_fallthru
      _
    // Predicated region
    $region6: #{tpu_custom_call.1} parent=1 // pred_check
      _
    $region7: #{tpu_custom_call.1} parent=1 // pred_check_branch
      %18 = sbr.rel (0) target = $region9
    $region8: #{tpu_custom_call.1} parent=1 // pred_region
      _
    $region9: #{tpu_custom_call.1} parent=1 // pred_fallthru
      _
    // Predicated region
    $region10: #{tpu_custom_call.1} parent=1 // pred_check
      _
    $region11: #{tpu_custom_call.1} parent=1 // pred_check_branch
      %20 = sbr.rel (0) target = $region13
    $region12: #{tpu_custom_call.1} parent=1 // pred_region
      _
    $region13: #{tpu_custom_call.1} parent=1 // pred_fallthru
      _
    // Predicated region
    $region14: #{tpu_custom_call.1} parent=1 // pred_check
      _
    $region15: #{tpu_custom_call.1} parent=1 // pred_check_branch
      %22 = sbr.rel (0) target = $region17
    $region16: #{tpu_custom_call.1} parent=1 // pred_region
      _
    $region17: #{tpu_custom_call.1} parent=1 // pred_fallthru
      _
    // Predicated region
    $region18: #{tpu_custom_call.1} parent=1 // pred_check
      _
    $region19: #{tpu_custom_call.1} parent=1 // pred_check_branch
      %24 = sbr.rel (0) target = $region21
    $region20: #{tpu_custom_call.1} parent=1 // pred_region
      _
    $region21: #{tpu_custom_call.1} parent=1 // pred_fallthru
      _
    // Predicated region
    $region22: #{tpu_custom_call.1} parent=1 // pred_check
      _
    $region23: #{tpu_custom_call.1} parent=1 // pred_check_branch
      %26 = sbr.rel (0) target = $region25
    $region24: #{tpu_custom_call.1} parent=1 // pred_region
      _
    $region25: #{tpu_custom_call.1} parent=1 // pred_fallthru
      _
    // Predicated region
    $region26: #{tpu_custom_call.1} parent=1 // pred_check
      _
    $region27: #{tpu_custom_call.1} parent=1 // pred_check_branch
      %28 = sbr.rel (0) target = $region29
    $region28: #{tpu_custom_call.1} parent=1 // pred_region
      _
    $region29: #{tpu_custom_call.1} parent=1 // pred_fallthru
      _
    // Predicated region
    $region30: #{tpu_custom_call.1} parent=1 // pred_check
      _
    $region31: #{tpu_custom_call.1} parent=1 // pred_check_branch
      %30 = sbr.rel (0) target = $region33
    $region32: #{tpu_custom_call.1} parent=1 // pred_region
      _
    $region33: #{tpu_custom_call.1} parent=1 // pred_fallthru
      _
    // Predicated region
    $region34: #{tpu_custom_call.1} parent=1 // pred_check
      _
    $region35: #{tpu_custom_call.1} parent=1 // pred_check_branch
      %32 = sbr.rel (0) target = $region37
    $region36: #{tpu_custom_call.1} parent=1 // pred_region
      _
    $region37: #{tpu_custom_call.1} parent=1 // pred_fallthru
      _
    %v33 = vld [vmem:[%s0] sm:$0xff]
    %v34 = vld [vmem:[%s0 + $0x8] sm:$0xff]
    %v35 = vld [vmem:[%s0 + $0x10] sm:$0xff]
    %v36 = vld [vmem:[%s0 + $0x18] sm:$0xff]
    %v37 = vld [vmem:[%s0 + $0x20] sm:$0xff]
    %v38 = vld [vmem:[%s0 + $0x28] sm:$0xff]
    %v39 = vld [vmem:[%s0 + $0x30] sm:$0xff]
    %v40 = vld [vmem:[%s0 + $0x38] sm:$0xff]
    %v41 = vld [vmem:[%s0 + $0x40] sm:$0xff]
    %v42 = vld [vmem:[%s0 + $0x48] sm:$0xff]
    %v43 = vld [vmem:[%s0 + $0x50] sm:$0xff]
    %v44 = vld [vmem:[%s0 + $0x58] sm:$0xff]
    %v45 = vld [vmem:[%s0 + $0x60] sm:$0xff]
    %v46 = vld [vmem:[%s0 + $0x68] sm:$0xff]
    %v47 = vld [vmem:[%s0 + $0x70] sm:$0xff]
    %v48 = vld [vmem:[%s0 + $0x78] sm:$0xff]
    %v49 = vld [vmem:[%s0 + $0x80] sm:$0xff]
    %v50 = vld [vmem:[%s0 + $0x88] sm:$0xff]
    %v51 = vld [vmem:[%s0 + $0x90] sm:$0xff]
    %v52 = vld [vmem:[%s0 + $0x98] sm:$0xff]
    %v53 = vld [vmem:[%s0 + $0xa0] sm:$0xff]
    %v54 = vld [vmem:[%s0 + $0xa8] sm:$0xff]
    %v55 = vld [vmem:[%s0 + $0xb0] sm:$0xff]
    %v56 = vld [vmem:[%s0 + $0xb8] sm:$0xff]
    %v57 = vld [vmem:[%s0 + $0xc0] sm:$0xff]
    %v58 = vld [vmem:[%s0 + $0xc8] sm:$0xff]
    %v59 = vld [vmem:[%s0 + $0xd0] sm:$0xff]
    %v60 = vld [vmem:[%s0 + $0xd8] sm:$0xff]
    %v61 = vld [vmem:[%s0 + $0xe0] sm:$0xff]
    %v62 = vld [vmem:[%s0 + $0xe8] sm:$0xff]
    %v63 = vld [vmem:[%s0 + $0xf0] sm:$0xff]
    %v64 = vld [vmem:[%s0 + $0xf8] sm:$0xff]
    %v65 = vld [vmem:[%s1] sm:$0xff]
    %v66 = vld [vmem:[%s1 + $0x8] sm:$0xff]
    %v67 = vld [vmem:[%s2] sm:$0x1]
    %v69 = vperm.slane %v67, 0
    %vm71 = vcmask 130048
    %v73 = vsel %vm71, %v33, 0
    %v76 = vsel %vm71, %v34, 0
    %v79 = vsel %vm71, %v35, 0
    %v82 = vsel %vm71, %v36, 0
    %v85 = vsel %vm71, %v37, 0
    %v88 = vsel %vm71, %v38, 0
    %v91 = vsel %vm71, %v39, 0
    %v94 = vsel %vm71, %v40, 0
    %v97 = vsel %vm71, %v41, 0
    %v100 = vsel %vm71, %v42, 0
    %v103 = vsel %vm71, %v43, 0
    %v106 = vsel %vm71, %v44, 0
    %v109 = vsel %vm71, %v45, 0
    %v112 = vsel %vm71, %v46, 0
    %v115 = vsel %vm71, %v47, 0
    %v118 = vsel %vm71, %v48, 0
    %v121 = vsel %vm71, %v49, 0
    %v124 = vsel %vm71, %v50, 0
    %v127 = vsel %vm71, %v51, 0
    %v130 = vsel %vm71, %v52, 0
    %v133 = vsel %vm71, %v53, 0
    %v136 = vsel %vm71, %v54, 0
    %v139 = vsel %vm71, %v55, 0
    %v142 = vsel %vm71, %v56, 0
    %v145 = vsel %vm71, %v57, 0
    %v148 = vsel %vm71, %v58, 0
    %v151 = vsel %vm71, %v59, 0
    %v154 = vsel %vm71, %v60, 0
    %v157 = vsel %vm71, %v61, 0
    %v160 = vsel %vm71, %v62, 0
    %v163 = vsel %vm71, %v63, 0
    %v166 = vsel %vm71, %v64, 0
    %168 = vmatpush.msra.mxu0 0.0
    %169 = vmatpush.msra.mxu0 0.0
    %170 = vmatpush.msra.mxu0 0.0
    %171 = vmatpush.msra.mxu0 0.0
    %172 = vmatpush.msra.mxu0 0.0
    %173 = vmatpush.msra.mxu0 0.0
    %174 = vmatpush.msra.mxu0 0.0
    %175 = vmatpush.msra.mxu0 0.0
    %176 = vmatpush.msra.mxu0 0.0
    %177 = vmatpush.msra.mxu0 0.0
    %178 = vmatpush.msra.mxu0 0.0
    %179 = vmatpush.msra.mxu0 0.0
    %180 = vmatpush.msra.mxu0 0.0
    %181 = vmatpush.msra.mxu0 0.0
    %182 = vmatpush.msra.mxu0 %v66
    %183 = vmatpush.msra.mxu0 %v65
    %184 = vmatmul.f32.gmra.mxu0 %v73
    %v185 = vpop.f32.mrf.mxu0
    %v186 = vadd.f32 %v69, %v185
    %187 = vmatmul.f32.gmra.mxu0 %v76
    %v188 = vpop.f32.mrf.mxu0
    %v189 = vadd.f32 %v69, %v188
    %190 = vmatmul.f32.gmra.mxu0 %v79
    %v191 = vpop.f32.mrf.mxu0
    %v192 = vadd.f32 %v69, %v191
    %193 = vmatmul.f32.gmra.mxu0 %v82
    %v194 = vpop.f32.mrf.mxu0
    %v195 = vadd.f32 %v69, %v194
    %196 = vmatmul.f32.gmra.mxu0 %v85
    %v197 = vpop.f32.mrf.mxu0
    %v198 = vadd.f32 %v69, %v197
    %199 = vmatmul.f32.gmra.mxu0 %v88
    %v200 = vpop.f32.mrf.mxu0
    %v201 = vadd.f32 %v69, %v200
    %202 = vmatmul.f32.gmra.mxu0 %v91
    %v203 = vpop.f32.mrf.mxu0
    %v204 = vadd.f32 %v69, %v203
    %205 = vmatmul.f32.gmra.mxu0 %v94
    %v206 = vpop.f32.mrf.mxu0
    %v207 = vadd.f32 %v69, %v206
    %208 = vmatmul.f32.gmra.mxu0 %v97
    %v209 = vpop.f32.mrf.mxu0
    %v210 = vadd.f32 %v69, %v209
    %211 = vmatmul.f32.gmra.mxu0 %v100
    %v212 = vpop.f32.mrf.mxu0
    %v213 = vadd.f32 %v69, %v212
    %214 = vmatmul.f32.gmra.mxu0 %v103
    %v215 = vpop.f32.mrf.mxu0
    %v216 = vadd.f32 %v69, %v215
    %217 = vmatmul.f32.gmra.mxu0 %v106
    %v218 = vpop.f32.mrf.mxu0
    %v219 = vadd.f32 %v69, %v218
    %220 = vmatmul.f32.gmra.mxu0 %v109
    %v221 = vpop.f32.mrf.mxu0
    %v222 = vadd.f32 %v69, %v221
    %223 = vmatmul.f32.gmra.mxu0 %v112
    %v224 = vpop.f32.mrf.mxu0
    %v225 = vadd.f32 %v69, %v224
    %226 = vmatmul.f32.gmra.mxu0 %v115
    %v227 = vpop.f32.mrf.mxu0
    %v228 = vadd.f32 %v69, %v227
    %229 = vmatmul.f32.gmra.mxu0 %v118
    %v230 = vpop.f32.mrf.mxu0
    %v231 = vadd.f32 %v69, %v230
    %232 = vmatmul.f32.gmra.mxu0 %v121
    %v233 = vpop.f32.mrf.mxu0
    %v234 = vadd.f32 %v69, %v233
    %235 = vmatmul.f32.gmra.mxu0 %v124
    %v236 = vpop.f32.mrf.mxu0
    %v237 = vadd.f32 %v69, %v236
    %238 = vmatmul.f32.gmra.mxu0 %v127
    %v239 = vpop.f32.mrf.mxu0
    %v240 = vadd.f32 %v69, %v239
    %241 = vmatmul.f32.gmra.mxu0 %v130
    %v242 = vpop.f32.mrf.mxu0
    %v243 = vadd.f32 %v69, %v242
    %244 = vmatmul.f32.gmra.mxu0 %v133
    %v245 = vpop.f32.mrf.mxu0
    %v246 = vadd.f32 %v69, %v245
    %247 = vmatmul.f32.gmra.mxu0 %v136
    %v248 = vpop.f32.mrf.mxu0
    %v249 = vadd.f32 %v69, %v248
    %250 = vmatmul.f32.gmra.mxu0 %v139
    %v251 = vpop.f32.mrf.mxu0
    %v252 = vadd.f32 %v69, %v251
    %253 = vmatmul.f32.gmra.mxu0 %v142
    %v254 = vpop.f32.mrf.mxu0
    %v255 = vadd.f32 %v69, %v254
    %256 = vmatmul.f32.gmra.mxu0 %v145
    %v257 = vpop.f32.mrf.mxu0
    %v258 = vadd.f32 %v69, %v257
    %259 = vmatmul.f32.gmra.mxu0 %v148
    %v260 = vpop.f32.mrf.mxu0
    %v261 = vadd.f32 %v69, %v260
    %262 = vmatmul.f32.gmra.mxu0 %v151
    %v263 = vpop.f32.mrf.mxu0
    %v264 = vadd.f32 %v69, %v263
    %265 = vmatmul.f32.gmra.mxu0 %v154
    %v266 = vpop.f32.mrf.mxu0
    %v267 = vadd.f32 %v69, %v266
    %268 = vmatmul.f32.gmra.mxu0 %v157
    %v269 = vpop.f32.mrf.mxu0
    %v270 = vadd.f32 %v69, %v269
    %271 = vmatmul.f32.gmra.mxu0 %v160
    %v272 = vpop.f32.mrf.mxu0
    %v273 = vadd.f32 %v69, %v272
    %274 = vmatmul.f32.gmra.mxu0 %v163
    %v275 = vpop.f32.mrf.mxu0
    %v276 = vadd.f32 %v69, %v275
    %277 = vmatmul.f32.gmra.mxu0 %v166
    %v278 = vpop.f32.mrf.mxu0
    %v279 = vadd.f32 %v69, %v278
    %280 = vdwg.mxu0
    %v281 = vmax.f32 %v186, 0.0
    %v282 = vmax.f32 %v189, 0.0
    %v283 = vmax.f32 %v192, 0.0
    %v284 = vmax.f32 %v195, 0.0
    %v285 = vmax.f32 %v198, 0.0
    %v286 = vmax.f32 %v201, 0.0
    %v287 = vmax.f32 %v204, 0.0
    %v288 = vmax.f32 %v207, 0.0
    %v289 = vmax.f32 %v210, 0.0
    %v290 = vmax.f32 %v213, 0.0
    %v291 = vmax.f32 %v216, 0.0
    %v292 = vmax.f32 %v219, 0.0
    %v293 = vmax.f32 %v222, 0.0
    %v294 = vmax.f32 %v225, 0.0
    %v295 = vmax.f32 %v228, 0.0
    %v296 = vmax.f32 %v231, 0.0
    %v297 = vmax.f32 %v234, 0.0
    %v298 = vmax.f32 %v237, 0.0
    %v299 = vmax.f32 %v240, 0.0
    %v300 = vmax.f32 %v243, 0.0
    %v301 = vmax.f32 %v246, 0.0
    %v302 = vmax.f32 %v249, 0.0
    %v303 = vmax.f32 %v252, 0.0
    %v304 = vmax.f32 %v255, 0.0
    %v305 = vmax.f32 %v258, 0.0
    %v306 = vmax.f32 %v261, 0.0
    %v307 = vmax.f32 %v264, 0.0
    %v308 = vmax.f32 %v267, 0.0
    %v309 = vmax.f32 %v270, 0.0
    %v310 = vmax.f32 %v273, 0.0
    %v311 = vmax.f32 %v276, 0.0
    %v312 = vmax.f32 %v279, 0.0
    %v313 = vld [vmem:[%s3] sm:$0xff]
    %v314 = vld [vmem:[%s3 + $0x8] sm:$0xff]
    %v315 = vld [vmem:[%s3 + $0x10] sm:$0xff]
    %v316 = vld [vmem:[%s3 + $0x18] sm:$0xff]
    %v317 = vld [vmem:[%s3 + $0x20] sm:$0xff]
    %v318 = vld [vmem:[%s3 + $0x28] sm:$0xff]
    %v319 = vld [vmem:[%s3 + $0x30] sm:$0xff]
    %v320 = vld [vmem:[%s3 + $0x38] sm:$0xff]
    %v321 = vld [vmem:[%s3 + $0x40] sm:$0xff]
    %v322 = vld [vmem:[%s3 + $0x48] sm:$0xff]
    %v323 = vld [vmem:[%s3 + $0x50] sm:$0xff]
    %v324 = vld [vmem:[%s3 + $0x58] sm:$0xff]
    %v325 = vld [vmem:[%s3 + $0x60] sm:$0xff]
    %v326 = vld [vmem:[%s3 + $0x68] sm:$0xff]
    %v327 = vld [vmem:[%s3 + $0x70] sm:$0xff]
    %v328 = vld [vmem:[%s3 + $0x78] sm:$0xff]
    %v329 = vld [vmem:[%s4] sm:$0x1]
    %v331 = vperm.slane %v329, 0
    %333 = vmatpush.msra.mxu0 %v328
    %334 = vmatpush.msra.mxu0 %v327
    %335 = vmatpush.msra.mxu0 %v326
    %336 = vmatpush.msra.mxu0 %v325
    %337 = vmatpush.msra.mxu0 %v324
    %338 = vmatpush.msra.mxu0 %v323
    %339 = vmatpush.msra.mxu0 %v322
    %340 = vmatpush.msra.mxu0 %v321
    %341 = vmatpush.msra.mxu0 %v320
    %342 = vmatpush.msra.mxu0 %v319
    %343 = vmatpush.msra.mxu0 %v318
    %344 = vmatpush.msra.mxu0 %v317
    %345 = vmatpush.msra.mxu0 %v316
    %346 = vmatpush.msra.mxu0 %v315
    %347 = vmatpush.msra.mxu0 %v314
    %348 = vmatpush.msra.mxu0 %v313
    %349 = vmatmul.f32.gmra.mxu0 %v281
    %v350 = vpop.f32.mrf.mxu0
    %v351 = vadd.f32 %v331, %v350
    %352 = vmatmul.f32.gmra.mxu0 %v282
    %v353 = vpop.f32.mrf.mxu0
    %v354 = vadd.f32 %v331, %v353
    %355 = vmatmul.f32.gmra.mxu0 %v283
    %v356 = vpop.f32.mrf.mxu0
    %v357 = vadd.f32 %v331, %v356
    %358 = vmatmul.f32.gmra.mxu0 %v284
    %v359 = vpop.f32.mrf.mxu0
    %v360 = vadd.f32 %v331, %v359
    %361 = vmatmul.f32.gmra.mxu0 %v285
    %v362 = vpop.f32.mrf.mxu0
    %v363 = vadd.f32 %v331, %v362
    %364 = vmatmul.f32.gmra.mxu0 %v286
    %v365 = vpop.f32.mrf.mxu0
    %v366 = vadd.f32 %v331, %v365
    %367 = vmatmul.f32.gmra.mxu0 %v287
    %v368 = vpop.f32.mrf.mxu0
    %v369 = vadd.f32 %v331, %v368
    %370 = vmatmul.f32.gmra.mxu0 %v288
    %v371 = vpop.f32.mrf.mxu0
    %v372 = vadd.f32 %v331, %v371
    %373 = vmatmul.f32.gmra.mxu0 %v289
    %v374 = vpop.f32.mrf.mxu0
    %v375 = vadd.f32 %v331, %v374
    %376 = vmatmul.f32.gmra.mxu0 %v290
    %v377 = vpop.f32.mrf.mxu0
    %v378 = vadd.f32 %v331, %v377
    %379 = vmatmul.f32.gmra.mxu0 %v291
    %v380 = vpop.f32.mrf.mxu0
    %v381 = vadd.f32 %v331, %v380
    %382 = vmatmul.f32.gmra.mxu0 %v292
    %v383 = vpop.f32.mrf.mxu0
    %v384 = vadd.f32 %v331, %v383
    %385 = vmatmul.f32.gmra.mxu0 %v293
    %v386 = vpop.f32.mrf.mxu0
    %v387 = vadd.f32 %v331, %v386
    %388 = vmatmul.f32.gmra.mxu0 %v294
    %v389 = vpop.f32.mrf.mxu0
    %v390 = vadd.f32 %v331, %v389
    %391 = vmatmul.f32.gmra.mxu0 %v295
    %v392 = vpop.f32.mrf.mxu0
    %v393 = vadd.f32 %v331, %v392
    %394 = vmatmul.f32.gmra.mxu0 %v296
    %v395 = vpop.f32.mrf.mxu0
    %v396 = vadd.f32 %v331, %v395
    %397 = vmatmul.f32.gmra.mxu0 %v297
    %v398 = vpop.f32.mrf.mxu0
    %v399 = vadd.f32 %v331, %v398
    %400 = vmatmul.f32.gmra.mxu0 %v298
    %v401 = vpop.f32.mrf.mxu0
    %v402 = vadd.f32 %v331, %v401
    %403 = vmatmul.f32.gmra.mxu0 %v299
    %v404 = vpop.f32.mrf.mxu0
    %v405 = vadd.f32 %v331, %v404
    %406 = vmatmul.f32.gmra.mxu0 %v300
    %v407 = vpop.f32.mrf.mxu0
    %v408 = vadd.f32 %v331, %v407
    %409 = vmatmul.f32.gmra.mxu0 %v301
    %v410 = vpop.f32.mrf.mxu0
    %v411 = vadd.f32 %v331, %v410
    %412 = vmatmul.f32.gmra.mxu0 %v302
    %v413 = vpop.f32.mrf.mxu0
    %v414 = vadd.f32 %v331, %v413
    %415 = vmatmul.f32.gmra.mxu0 %v303
    %v416 = vpop.f32.mrf.mxu0
    %v417 = vadd.f32 %v331, %v416
    %418 = vmatmul.f32.gmra.mxu0 %v304
    %v419 = vpop.f32.mrf.mxu0
    %v420 = vadd.f32 %v331, %v419
    %421 = vmatmul.f32.gmra.mxu0 %v305
    %v422 = vpop.f32.mrf.mxu0
    %v423 = vadd.f32 %v331, %v422
    %424 = vmatmul.f32.gmra.mxu0 %v306
    %v425 = vpop.f32.mrf.mxu0
    %v426 = vadd.f32 %v331, %v425
    %427 = vmatmul.f32.gmra.mxu0 %v307
    %v428 = vpop.f32.mrf.mxu0
    %v429 = vadd.f32 %v331, %v428
    %430 = vmatmul.f32.gmra.mxu0 %v308
    %v431 = vpop.f32.mrf.mxu0
    %v432 = vadd.f32 %v331, %v431
    %433 = vmatmul.f32.gmra.mxu0 %v309
    %v434 = vpop.f32.mrf.mxu0
    %v435 = vadd.f32 %v331, %v434
    %436 = vmatmul.f32.gmra.mxu0 %v310
    %v437 = vpop.f32.mrf.mxu0
    %v438 = vadd.f32 %v331, %v437
    %439 = vmatmul.f32.gmra.mxu0 %v311
    %v440 = vpop.f32.mrf.mxu0
    %v441 = vadd.f32 %v331, %v440
    %442 = vmatmul.f32.gmra.mxu0 %v312
    %v443 = vpop.f32.mrf.mxu0
    %v444 = vadd.f32 %v331, %v443
    %445 = vdwg.mxu0
    %v446 = vlaneseq
    %v447 = vshrl.u32 %v446, 7
    %v448 = vadd.s32 %v447, 8
    %v449 = vadd.s32 %v447, 16
    %v450 = vadd.s32 %v447, 24
    %v451 = vadd.s32 %v447, 32
    %v452 = vadd.s32 %v447, 40
    %v453 = vadd.s32 %v447, 48
    %v454 = vadd.s32 %v447, 56
    %v455 = vadd.s32 %v447, 64
    %v456 = vadd.s32 %v447, 72
    %v457 = vadd.s32 %v447, 80
    %v458 = vadd.s32 %v447, 88
    %v459 = vadd.s32 %v447, 96
    %v460 = vadd.s32 %v447, 104
    %v461 = vadd.s32 %v447, 112
    %v462 = vadd.s32 %v447, 120
    %v463 = vadd.s32 %v447, 128
    %v464 = vadd.s32 %v447, 136
    %v465 = vadd.s32 %v447, 144
    %v466 = vadd.s32 %v447, 152
    %v467 = vadd.s32 %v447, 160
    %v468 = vadd.s32 %v447, 168
    %v469 = vadd.s32 %v447, 176
    %v470 = vadd.s32 %v447, 184
    %v471 = vadd.s32 %v447, 192
    %v472 = vadd.s32 %v447, 200
    %v473 = vadd.s32 %v447, 208
    %v474 = vadd.s32 %v447, 216
    %v475 = vadd.s32 %v447, 224
    %v476 = vadd.s32 %v447, 232
    %v477 = vadd.s32 %v447, 240
    %v478 = vadd.s32 %v447, 248
    %vm479 = vcmp.lt.s32.totalorder %v447, 200
    %vm480 = vcmp.lt.s32.totalorder %v448, 200
    %vm481 = vcmp.lt.s32.totalorder %v449, 200
    %vm482 = vcmp.lt.s32.totalorder %v450, 200
    %vm483 = vcmp.lt.s32.totalorder %v451, 200
    %vm484 = vcmp.lt.s32.totalorder %v452, 200
    %vm485 = vcmp.lt.s32.totalorder %v453, 200
    %vm486 = vcmp.lt.s32.totalorder %v454, 200
    %vm487 = vcmp.lt.s32.totalorder %v455, 200
    %vm488 = vcmp.lt.s32.totalorder %v456, 200
    %vm489 = vcmp.lt.s32.totalorder %v457, 200
    %vm490 = vcmp.lt.s32.totalorder %v458, 200
    %vm491 = vcmp.lt.s32.totalorder %v459, 200
    %vm492 = vcmp.lt.s32.totalorder %v460, 200
    %vm493 = vcmp.lt.s32.totalorder %v461, 200
    %vm494 = vcmp.lt.s32.totalorder %v462, 200
    %vm495 = vcmp.lt.s32.totalorder %v463, 200
    %vm496 = vcmp.lt.s32.totalorder %v464, 200
    %vm497 = vcmp.lt.s32.totalorder %v465, 200
    %vm498 = vcmp.lt.s32.totalorder %v466, 200
    %vm499 = vcmp.lt.s32.totalorder %v467, 200
    %vm500 = vcmp.lt.s32.totalorder %v468, 200
    %vm501 = vcmp.lt.s32.totalorder %v469, 200
    %vm502 = vcmp.lt.s32.totalorder %v470, 200
    %vm503 = vcmp.lt.s32.totalorder %v471, 200
    %vm504 = vcmp.lt.s32.totalorder %v472, 200
    %vm505 = vcmp.lt.s32.totalorder %v473, 200
    %vm506 = vcmp.lt.s32.totalorder %v474, 200
    %vm507 = vcmp.lt.s32.totalorder %v475, 200
    %vm508 = vcmp.lt.s32.totalorder %v476, 200
    %vm509 = vcmp.lt.s32.totalorder %v477, 200
    %vm510 = vcmp.lt.s32.totalorder %v478, 200
    %v511 = vsel %vm479, %v351, 0.0
    %v512 = vsel %vm480, %v354, 0.0
    %v513 = vsel %vm481, %v357, 0.0
    %v514 = vsel %vm482, %v360, 0.0
    %v515 = vsel %vm483, %v363, 0.0
    %v516 = vsel %vm484, %v366, 0.0
    %v517 = vsel %vm485, %v369, 0.0
    %v518 = vsel %vm486, %v372, 0.0
    %v519 = vsel %vm487, %v375, 0.0
    %v520 = vsel %vm488, %v378, 0.0
    %v521 = vsel %vm489, %v381, 0.0
    %v522 = vsel %vm490, %v384, 0.0
    %v523 = vsel %vm491, %v387, 0.0
    %v524 = vsel %vm492, %v390, 0.0
    %v525 = vsel %vm493, %v393, 0.0
    %v526 = vsel %vm494, %v396, 0.0
    %v527 = vsel %vm495, %v399, 0.0
    %v528 = vsel %vm496, %v402, 0.0
    %v529 = vsel %vm497, %v405, 0.0
    %v530 = vsel %vm498, %v408, 0.0
    %v531 = vsel %vm499, %v411, 0.0
    %v532 = vsel %vm500, %v414, 0.0
    %v533 = vsel %vm501, %v417, 0.0
    %v534 = vsel %vm502, %v420, 0.0
    %v535 = vsel %vm503, %v423, 0.0
    %v536 = vsel %vm504, %v426, 0.0
    %v537 = vsel %vm505, %v429, 0.0
    %v538 = vsel %vm506, %v432, 0.0
    %v539 = vsel %vm507, %v435, 0.0
    %v540 = vsel %vm508, %v438, 0.0
    %v541 = vsel %vm509, %v441, 0.0
    %v542 = vsel %vm510, %v444, 0.0
    %v543 = vadd.f32 %v511, %v512
    %v544 = vadd.f32 %v543, %v513
    %v545 = vadd.f32 %v544, %v514
    %v546 = vadd.f32 %v545, %v515
    %v547 = vadd.f32 %v546, %v516
    %v548 = vadd.f32 %v547, %v517
    %v549 = vadd.f32 %v548, %v518
    %v550 = vadd.f32 %v549, %v519
    %v551 = vadd.f32 %v550, %v520
    %v552 = vadd.f32 %v551, %v521
    %v553 = vadd.f32 %v552, %v522
    %v554 = vadd.f32 %v553, %v523
    %v555 = vadd.f32 %v554, %v524
    %v556 = vadd.f32 %v555, %v525
    %v557 = vadd.f32 %v556, %v526
    %v558 = vadd.f32 %v557, %v527
    %v559 = vadd.f32 %v558, %v528
    %v560 = vadd.f32 %v559, %v529
    %v561 = vadd.f32 %v560, %v530
    %v562 = vadd.f32 %v561, %v531
    %v563 = vadd.f32 %v562, %v532
    %v564 = vadd.f32 %v563, %v533
    %v565 = vadd.f32 %v564, %v534
    %v566 = vadd.f32 %v565, %v535
    %v567 = vadd.f32 %v566, %v536
    %v568 = vadd.f32 %v567, %v537
    %v569 = vadd.f32 %v568, %v538
    %v570 = vadd.f32 %v569, %v539
    %v571 = vadd.f32 %v570, %v540
    %v572 = vadd.f32 %v571, %v541
    %v573 = vadd.f32 %v572, %v542
    %v574 = vrot.slane %v573, 4
    %v575 = vadd.f32 %v573, %v574
    %v576 = vrot.slane %v575, 2
    %v577 = vadd.f32 %v575, %v576
    %v578 = vrot.slane %v577, 1
    %v579 = vadd.f32 %v577, %v578
    %v580 = vmul.f32 %v511, %v511
    %v581 = vmul.f32 %v512, %v512
    %v582 = vmul.f32 %v513, %v513
    %v583 = vmul.f32 %v514, %v514
    %v584 = vmul.f32 %v515, %v515
    %v585 = vmul.f32 %v516, %v516
    %v586 = vmul.f32 %v517, %v517
    %v587 = vmul.f32 %v518, %v518
    %v588 = vmul.f32 %v519, %v519
    %v589 = vmul.f32 %v520, %v520
    %v590 = vmul.f32 %v521, %v521
    %v591 = vmul.f32 %v522, %v522
    %v592 = vmul.f32 %v523, %v523
    %v593 = vmul.f32 %v524, %v524
    %v594 = vmul.f32 %v525, %v525
    %v595 = vmul.f32 %v526, %v526
    %v596 = vmul.f32 %v527, %v527
    %v597 = vmul.f32 %v528, %v528
    %v598 = vmul.f32 %v529, %v529
    %v599 = vmul.f32 %v530, %v530
    %v600 = vmul.f32 %v531, %v531
    %v601 = vmul.f32 %v532, %v532
    %v602 = vmul.f32 %v533, %v533
    %v603 = vmul.f32 %v534, %v534
    %v604 = vmul.f32 %v535, %v535
    %v605 = vmul.f32 %v536, %v536
    %v606 = vmul.f32 %v537, %v537
    %v607 = vmul.f32 %v538, %v538
    %v608 = vmul.f32 %v539, %v539
    %v609 = vmul.f32 %v540, %v540
    %v610 = vmul.f32 %v541, %v541
    %v611 = vmul.f32 %v542, %v542
    %v612 = vadd.f32 %v580, %v581
    %v613 = vadd.f32 %v612, %v582
    %v614 = vadd.f32 %v613, %v583
    %v615 = vadd.f32 %v614, %v584
    %v616 = vadd.f32 %v615, %v585
    %v617 = vadd.f32 %v616, %v586
    %v618 = vadd.f32 %v617, %v587
    %v619 = vadd.f32 %v618, %v588
    %v620 = vadd.f32 %v619, %v589
    %v621 = vadd.f32 %v620, %v590
    %v622 = vadd.f32 %v621, %v591
    %v623 = vadd.f32 %v622, %v592
    %v624 = vadd.f32 %v623, %v593
    %v625 = vadd.f32 %v624, %v594
    %v626 = vadd.f32 %v625, %v595
    %v627 = vadd.f32 %v626, %v596
    %v628 = vadd.f32 %v627, %v597
    %v629 = vadd.f32 %v628, %v598
    %v630 = vadd.f32 %v629, %v599
    %v631 = vadd.f32 %v630, %v600
    %v632 = vadd.f32 %v631, %v601
    %v633 = vadd.f32 %v632, %v602
    %v634 = vadd.f32 %v633, %v603
    %v635 = vadd.f32 %v634, %v604
    %v636 = vadd.f32 %v635, %v605
    %v637 = vadd.f32 %v636, %v606
    %v638 = vadd.f32 %v637, %v607
    %v639 = vadd.f32 %v638, %v608
    %v640 = vadd.f32 %v639, %v609
    %v641 = vadd.f32 %v640, %v610
    %v642 = vadd.f32 %v641, %v611
    %v643 = vrot.slane %v642, 4
    %v644 = vadd.f32 %v642, %v643
    %v645 = vrot.slane %v644, 2
    %v646 = vadd.f32 %v644, %v645
    %v647 = vrot.slane %v646, 1
    %v648 = vadd.f32 %v646, %v647
    %v649 = vmul.f32 %v579, 0.005
    %v650 = vmul.f32 %v648, 0.005
    %v651 = vmul.f32 %v649, %v649
    %v652 = vsub.f32 %v650, %v651
    %v653 = vmax.f32 %v652, 0.0
    %v654 = vld [vmem:[%s5] sm:$0x1]
    %v655 = vadd.f32 %v653, 1e-05
    %v656 = vrsqrt.pop %v655
    %v657 = vmul.f32 %v656, %v655
    %v658 = vmul.f32 %v657, %v656
    %v659 = vmul.f32 0.5, %v658
    %v660 = vsub.f32 1.5, %v659
    %v661 = vmul.f32 %v656, %v660
    %vm662 = vweird.f32 %v655
    %vm663 = vweird.f32 %v656
    %vm664 = vmor %vm662, %vm663
    %v665 = vsel %vm664, %v656, %v661
    %v666 = vmul.f32 %v654, %v665
    %v667 = vld [vmem:[%s6] sm:$0x1]
    %v668 = vmul.f32 %v649, %v666
    %v669 = vsub.f32 %v667, %v668
    %v671 = vperm.slane %v666, 0
    %v673 = vmul.f32 %v351, %v671
    %v674 = vmul.f32 %v354, %v671
    %v675 = vmul.f32 %v357, %v671
    %v676 = vmul.f32 %v360, %v671
    %v677 = vmul.f32 %v363, %v671
    %v678 = vmul.f32 %v366, %v671
    %v679 = vmul.f32 %v369, %v671
    %v680 = vmul.f32 %v372, %v671
    %v681 = vmul.f32 %v375, %v671
    %v682 = vmul.f32 %v378, %v671
    %v683 = vmul.f32 %v381, %v671
    %v684 = vmul.f32 %v384, %v671
    %v685 = vmul.f32 %v387, %v671
    %v686 = vmul.f32 %v390, %v671
    %v687 = vmul.f32 %v393, %v671
    %v688 = vmul.f32 %v396, %v671
    %v689 = vmul.f32 %v399, %v671
    %v690 = vmul.f32 %v402, %v671
    %v691 = vmul.f32 %v405, %v671
    %v692 = vmul.f32 %v408, %v671
    %v693 = vmul.f32 %v411, %v671
    %v694 = vmul.f32 %v414, %v671
    %v695 = vmul.f32 %v417, %v671
    %v696 = vmul.f32 %v420, %v671
    %v697 = vmul.f32 %v423, %v671
    %v698 = vmul.f32 %v426, %v671
    %v699 = vmul.f32 %v429, %v671
    %v700 = vmul.f32 %v432, %v671
    %v701 = vmul.f32 %v435, %v671
    %v702 = vmul.f32 %v438, %v671
    %v703 = vmul.f32 %v441, %v671
    %v704 = vmul.f32 %v444, %v671
    %v706 = vperm.slane %v669, 0
    %v708 = vadd.f32 %v673, %v706
    %v709 = vadd.f32 %v674, %v706
    %v710 = vadd.f32 %v675, %v706
    %v711 = vadd.f32 %v676, %v706
    %v712 = vadd.f32 %v677, %v706
    %v713 = vadd.f32 %v678, %v706
    %v714 = vadd.f32 %v679, %v706
    %v715 = vadd.f32 %v680, %v706
    %v716 = vadd.f32 %v681, %v706
    %v717 = vadd.f32 %v682, %v706
    %v718 = vadd.f32 %v683, %v706
    %v719 = vadd.f32 %v684, %v706
    %v720 = vadd.f32 %v685, %v706
    %v721 = vadd.f32 %v686, %v706
    %v722 = vadd.f32 %v687, %v706
    %v723 = vadd.f32 %v688, %v706
    %v724 = vadd.f32 %v689, %v706
    %v725 = vadd.f32 %v690, %v706
    %v726 = vadd.f32 %v691, %v706
    %v727 = vadd.f32 %v692, %v706
    %v728 = vadd.f32 %v693, %v706
    %v729 = vadd.f32 %v694, %v706
    %v730 = vadd.f32 %v695, %v706
    %v731 = vadd.f32 %v696, %v706
    %v732 = vadd.f32 %v697, %v706
    %v733 = vadd.f32 %v698, %v706
    %v734 = vadd.f32 %v699, %v706
    %v735 = vadd.f32 %v700, %v706
    %v736 = vadd.f32 %v701, %v706
    %v737 = vadd.f32 %v702, %v706
    %v738 = vadd.f32 %v703, %v706
    %v739 = vadd.f32 %v704, %v706
    %v740 = vmax.f32 %v708, 0.0
    %v741 = vmax.f32 %v709, 0.0
    %v742 = vmax.f32 %v710, 0.0
    %v743 = vmax.f32 %v711, 0.0
    %v744 = vmax.f32 %v712, 0.0
    %v745 = vmax.f32 %v713, 0.0
    %v746 = vmax.f32 %v714, 0.0
    %v747 = vmax.f32 %v715, 0.0
    %v748 = vmax.f32 %v716, 0.0
    %v749 = vmax.f32 %v717, 0.0
    %v750 = vmax.f32 %v718, 0.0
    %v751 = vmax.f32 %v719, 0.0
    %v752 = vmax.f32 %v720, 0.0
    %v753 = vmax.f32 %v721, 0.0
    %v754 = vmax.f32 %v722, 0.0
    %v755 = vmax.f32 %v723, 0.0
    %v756 = vmax.f32 %v724, 0.0
    %v757 = vmax.f32 %v725, 0.0
    %v758 = vmax.f32 %v726, 0.0
    %v759 = vmax.f32 %v727, 0.0
    %v760 = vmax.f32 %v728, 0.0
    %v761 = vmax.f32 %v729, 0.0
    %v762 = vmax.f32 %v730, 0.0
    %v763 = vmax.f32 %v731, 0.0
    %v764 = vmax.f32 %v732, 0.0
    %v765 = vmax.f32 %v733, 0.0
    %v766 = vmax.f32 %v734, 0.0
    %v767 = vmax.f32 %v735, 0.0
    %v768 = vmax.f32 %v736, 0.0
    %v769 = vmax.f32 %v737, 0.0
    %v770 = vmax.f32 %v738, 0.0
    %v771 = vmax.f32 %v739, 0.0
    %v772 = vld [vmem:[%s7] sm:$0xff]
    %v773 = vld [vmem:[%s8] sm:$0xff]
    %775 = vset.pattern.permute.xlu0 0
    %776 = vperm.xlu0 %775, %v773
    %v777 = vpop.permute.xlu0 %776
    %779 = vmatpush.xpose.msra.mxu0 %v755
    %780 = vmatpush.xpose.msra.mxu0 %v754
    %781 = vmatpush.xpose.msra.mxu0 %v753
    %782 = vmatpush.xpose.msra.mxu0 %v752
    %783 = vmatpush.xpose.msra.mxu0 %v751
    %784 = vmatpush.xpose.msra.mxu0 %v750
    %785 = vmatpush.xpose.msra.mxu0 %v749
    %786 = vmatpush.xpose.msra.mxu0 %v748
    %787 = vmatpush.xpose.msra.mxu0 %v747
    %788 = vmatpush.xpose.msra.mxu0 %v746
    %789 = vmatpush.xpose.msra.mxu0 %v745
    %790 = vmatpush.xpose.msra.mxu0 %v744
    %791 = vmatpush.xpose.msra.mxu0 %v743
    %792 = vmatpush.xpose.msra.mxu0 %v742
    %793 = vmatpush.xpose.msra.mxu0 %v741
    %794 = vmatpush.xpose.msra.mxu0 %v740
    %795 = vmatmul.f32.gmra.mxu0 %v772
    %v796 = vpop.f32.mrf.mxu0
    %v797 = vadd.f32 %v777, %v796
    %798 = vdwg.mxu0
    %799 = vmatpush.xpose.msra.mxu0 %v771
    %800 = vmatpush.xpose.msra.mxu0 %v770
    %801 = vmatpush.xpose.msra.mxu0 %v769
    %802 = vmatpush.xpose.msra.mxu0 %v768
    %803 = vmatpush.xpose.msra.mxu0 %v767
    %804 = vmatpush.xpose.msra.mxu0 %v766
    %805 = vmatpush.xpose.msra.mxu0 %v765
    %806 = vmatpush.xpose.msra.mxu0 %v764
    %807 = vmatpush.xpose.msra.mxu0 %v763
    %808 = vmatpush.xpose.msra.mxu0 %v762
    %809 = vmatpush.xpose.msra.mxu0 %v761
    %810 = vmatpush.xpose.msra.mxu0 %v760
    %811 = vmatpush.xpose.msra.mxu0 %v759
    %812 = vmatpush.xpose.msra.mxu0 %v758
    %813 = vmatpush.xpose.msra.mxu0 %v757
    %814 = vmatpush.xpose.msra.mxu0 %v756
    %815 = vmatmul.f32.gmra.mxu0 %v772
    %v816 = vpop.f32.mrf.mxu0
    %v817 = vadd.f32 %v777, %v816
    %818 = vdwg.mxu0
    %819 = vst [vmem:[#allocation2] sm:$0xff] %v797
    %820 = vst [vmem:[#allocation2 + $0x8] sm:$0xff] %v817
    // Predicated region
    $region38: #{tpu_custom_call.1} parent=1 // pred_check
      _
    $region39: #{tpu_custom_call.1} parent=1 // pred_check_branch
      %822 = sbr.rel (0) target = $region41
    $region40: #{tpu_custom_call.1} parent=1 // pred_region
      %824 = vsyncadd [#allocation3], 0
      %s826 = sshll.u32 [#allocation2], 4
      %s827 = int_to_ptr.vmem [resolvable:$true] %s826
      %s828 = sshll.u32 %s9, 4
      %s829 = int_to_ptr.hbm [resolvable:$true] %s828
      %831 = dma.vmem_to_hbm [thread:$0]  %s827, 256, %s829, [#allocation3]
    $region41: #{tpu_custom_call.1} parent=1 // pred_fallthru
      _
    // Predicated region
    $region42: #{tpu_custom_call.1} parent=1 // pred_check
      _
    $region43: #{tpu_custom_call.1} parent=1 // pred_check_branch
      %833 = sbr.rel (0) target = $region45
    $region44: #{tpu_custom_call.1} parent=1 // pred_region
      %835 = dma.done [#allocation3], 256
    $region45: #{tpu_custom_call.1} parent=1 // pred_fallthru
      _
    %836 = vsyncpa [#allocation3], 1

</llo_original>
